<compile_context>
chip_gen: v7x
topology: tpu7x:2x2x1
jax: 0.10.0
libtpu: 0.0.40
codegen_flags: <defaults>
</compile_context>

<pallas_src>
import jax
import jax.numpy as jnp
import numpy as np
from jax import lax
from jax.experimental import pallas as pl
from jax.experimental.pallas import tpu as pltpu


def _round_up(x, m):
    return (x + m - 1) // m * m


def _pick_row_tile(Ho, Wo_pad, k, ck, c2, *, vmem_budget_bytes=40 * 1024 * 1024):
    """Largest row tile TH (divisor of Ho) whose working set fits the VMEM budget,
    preferring TH*Wo_pad a multiple of 256 (v6e/v7x MXU / lane tile), else 128."""
    def est_bytes(th):
        slab = th + k - 1
        px = th * Wo_pad
        in_tile = slab * _round_up(Wo_pad, 16) * _round_up(ck, 128) * 2   # bf16 input slab
        out_tile = _round_up(c2, 16) * px * 2                             # bf16 output tile
        acc = _round_up(c2, 8) * px * 4                                   # f32 accumulator
        wts = k * _round_up(c2, 16) * _round_up(ck, 128) * 2              # bf16 weights
        return 2 * in_tile + 2 * out_tile + acc + wts                     # double-buffered I/O

    divisors = [t for t in range(Ho, 0, -1) if Ho % t == 0]               # largest first
    fitting = [t for t in divisors if est_bytes(t) <= vmem_budget_bytes] or [1]
    for mult in (256, 128):
        for t in fitting:
            if (t * Wo_pad) % mult == 0:
                return t, est_bytes(t)
    # TODO(synk): no lane-dense tile exists (TH*Wo_pad never a multiple of 128); this falls back
    #             to masked partial stores -- pad Wo further upstream instead for real shapes.
    return fitting[0], est_bytes(fitting[0])


def _make_kernel(k, th, wo_pad):
    px = th * wo_pad

    def kernel(x_ref, w_ref, shift_ref, o_ref):
        # x_ref:     (1, 1, th+k-1, wo_pad, k*C1) bf16 -- dx taps packed on the lane dim
        # w_ref:     (k, C2, k*C1)                bf16 -- BN scale already folded in
        # shift_ref: (C2, 1)                      f32  -- BN folded shift
        # o_ref:     (1, C2, th*wo_pad)           bf16 -- channels-major, pixel-flattened
        ck = x_ref.shape[-1]
        acc = None
        for dy in range(k):                                   # k matmuls, K = k*C1
            patch = x_ref[0, 0, dy:dy + th, :, :]             # (th, wo_pad, ck)
            patch = patch.reshape(px, ck)                     # lane dim unchanged
            part = lax.dot_general(w_ref[dy], patch,
                                   (((1,), (1,)), ((), ())),
                                   preferred_element_type=jnp.float32)   # (C2, px)
            acc = part if acc is None else acc + part
        y = acc + shift_ref[...]                              # BN shift (scale folded into w)
        # SiLU. f32 sigmoid is safe on every generation; on v6e/v7x a bf16 EUP sigmoid
        # (cast y to bf16 first) roughly doubles the transcendental rate.
        o_ref[0] = (y * jax.nn.sigmoid(y)).astype(o_ref.dtype)

    return kernel


def conv_bn_silu(x_nchw, weight_oihw, gamma, beta, running_mean, running_var,
                 *, k=3, s=1, p=None, eps=1e-3):
    """Pallas equivalent of Conv.forward (conv -> bn -> SiLU). NCHW in, NCHW (bf16) out."""
    if p is None:
        p = k // 2  # autopad
    assert s == 1, "kernel implemented for stride 1"
    # TODO(synk): grouped conv (g > 1) and stride > 1 not implemented.

    N, C1, H, W = x_nchw.shape
    C2 = weight_oihw.shape[0]
    Ho = (H + 2 * p - k) // s + 1
    Wo = (W + 2 * p - k) // s + 1
    Wo_pad = _round_up(Wo, 16)          # bf16 sublane tile -> relayout-free (th,Wo,K) flatten
    ck = k * C1

    TH, est = _pick_row_tile(Ho, Wo_pad, k, ck, C2)
    R = Ho // TH
    slab = TH + k - 1
    px = TH * Wo_pad

    # ---- wrapper pre-pass (one XLA fusion): NCHW->NHWC, zero-pad, gather overlapping row
    #      slabs, pack dx taps onto the channel dim, pad Wo, cast bf16. ----------------------
    x = jnp.transpose(x_nchw, (0, 2, 3, 1))                           # (N, H, W, C1)
    x = jnp.pad(x, ((0, 0), (p, p), (p, p), (0, 0)))                  # (N, Hp, Wp, C1)
    row_idx = jnp.arange(R)[:, None] * TH + jnp.arange(slab)[None, :]
    slabs = x[:, row_idx]                                             # (N, R, slab, Wp, C1)
    xp = jnp.concatenate([slabs[..., dx:dx + Wo, :] for dx in range(k)], axis=-1)
    if Wo_pad > Wo:
        xp = jnp.pad(xp, ((0, 0), (0, 0), (0, 0), (0, Wo_pad - Wo), (0, 0)))
    xp = xp.astype(jnp.bfloat16)                                      # (N, R, slab, Wo_pad, k*C1)

    # ---- fold BN scale into the conv weights (in f32), pack per-dy (C2, k*C1) matrices -----
    scale = gamma / jnp.sqrt(running_var + eps)                       # f32
    shift = (beta - running_mean * scale).astype(jnp.float32).reshape(C2, 1)
    w = weight_oihw.astype(jnp.float32) * scale[:, None, None, None]  # (C2, C1, k, k)
    w = jnp.transpose(w, (2, 3, 1, 0)).reshape(k, ck, C2)             # [dy, dx*C1 + c, o]
    w = jnp.transpose(w, (0, 2, 1)).astype(jnp.bfloat16)              # (k, C2, k*C1)

    vmem_limit = int(min(56 * 2**20, max(32 * 2**20, int(1.5 * est))))

    kernel = _make_kernel(k, TH, Wo_pad)
    out_flat = pl.pallas_call(
        kernel,
        out_shape=jax.ShapeDtypeStruct((N, C2, Ho * Wo_pad), jnp.bfloat16),
        grid=(N, R),
        in_specs=[
            pl.BlockSpec((1, 1, slab, Wo_pad, ck), lambda n, r: (n, r, 0, 0, 0)),
            pl.BlockSpec((k, C2, ck), lambda n, r: (0, 0, 0)),
            pl.BlockSpec((C2, 1), lambda n, r: (0, 0)),
        ],
        out_specs=pl.BlockSpec((1, C2, px), lambda n, r: (n, 0, r)),
        compiler_params=pltpu.CompilerParams(
            dimension_semantics=("parallel", "parallel"),
            vmem_limit_bytes=vmem_limit),
    )(xp, w, shift)

    # (N, C2, Ho*Wo_pad) -> (N, C2, Ho, Wo_pad) is a contiguous reshape; drop width padding.
    return out_flat.reshape(N, C2, Ho, Wo_pad)[:, :, :, :Wo]


def _reference(x_nchw, weight_oihw, gamma, beta, mean, var, *, k=3, p=1, eps=1e-3):
    conv = lax.conv_general_dilated(
        x_nchw, weight_oihw, window_strides=(1, 1), padding=[(p, p), (p, p)],
        dimension_numbers=("NCHW", "OIHW", "NCHW"))
    bn = (conv - mean[None, :, None, None]) / jnp.sqrt(var + eps)[None, :, None, None]
    bn = bn * gamma[None, :, None, None] + beta[None, :, None, None]
    return bn * jax.nn.sigmoid(bn)


if __name__ == "__main__":
    # Conv(c1=4, c2=8, k=3, s=1) -- small synthetic shapes, deterministic params.
    N, C1, H, W = 2, 4, 16, 16
    C2, K = 8, 3

    key = jax.random.PRNGKey(0)
    kx, kw, kg, kb, km, kv = jax.random.split(key, 6)

    x = jax.random.normal(kx, (N, C1, H, W), dtype=jnp.float32)
    weight = 0.1 * jax.random.normal(kw, (C2, C1, K, K), dtype=jnp.float32)       # nn.Conv2d weight (OIHW)
    gamma = 1.0 + 0.1 * jax.random.normal(kg, (C2,), dtype=jnp.float32)           # bn.weight
    beta = 0.1 * jax.random.normal(kb, (C2,), dtype=jnp.float32)                  # bn.bias
    running_mean = 0.1 * jax.random.normal(km, (C2,), dtype=jnp.float32)          # bn.running_mean
    running_var = jnp.abs(jax.random.normal(kv, (C2,), dtype=jnp.float32)) + 0.5  # bn.running_var

    out = conv_bn_silu(x, weight, gamma, beta, running_mean, running_var,
                       k=K, s=1, eps=1e-3)
    out = jax.block_until_ready(out)

    ref = _reference(x, weight, gamma, beta, running_mean, running_var,
                     k=K, p=K // 2, eps=1e-3)
    ref = jax.block_until_ready(ref)

    assert out.shape == (N, C2, H, W), out.shape
    # Tolerance accounts for bf16 matmul operands and the bf16 output store (f32 accumulation).
    np.testing.assert_allclose(np.asarray(out.astype(jnp.float32)), np.asarray(ref),
                               atol=5e-2, rtol=5e-2)

    print("KERNEL_OK")
</pallas_src>

<mosaic_0001>
module attributes {stable_mosaic.version = 11 : i64} {
  func.func @kernel(%arg0: i32, %arg1: i32, %arg2: memref<1x1x18x16x12xbf16, #tpu.memory_space<vmem>>, %arg3: memref<3x8x12xbf16, #tpu.memory_space<vmem>>, %arg4: memref<8x1xf32, #tpu.memory_space<vmem>>, %arg5: memref<1x8x256xbf16, #tpu.memory_space<vmem>>) attributes {dimension_semantics = [#tpu.dimension_semantics<parallel>, #tpu.dimension_semantics<parallel>], iteration_bounds = array<i64: 2, 1>, scalar_prefetch = 0 : i64, scratch_operands = 0 : i64, tpu.core_type = #tpu.core_type<tc>, window_params = [{transform_indices = @transform_0, window_bounds = array<i64: 1, 1, 18, 16, 12>}, {pipeline_mode = #tpu.pipeline_mode<synchronous>, transform_indices = @transform_1, window_bounds = array<i64: 3, 8, 12>}, {pipeline_mode = #tpu.pipeline_mode<synchronous>, transform_indices = @transform_2, window_bounds = array<i64: 8, 1>}, {transform_indices = @transform_3, window_bounds = array<i64: 1, 8, 256>}]} {
    %c0 = arith.constant 0 : index
    %c0_0 = arith.constant 0 : index
    %c0_1 = arith.constant 0 : index
    %c0_2 = arith.constant 0 : index
    %c0_3 = arith.constant 0 : index
    %0 = vector.load %arg2[%c0, %c0_0, %c0_1, %c0_2, %c0_3] : memref<1x1x18x16x12xbf16, #tpu.memory_space<vmem>>, vector<1x1x16x16x12xbf16>
    %1 = vector.shape_cast %0 : vector<1x1x16x16x12xbf16> to vector<16x16x12xbf16>
    %2 = vector.shape_cast %1 : vector<16x16x12xbf16> to vector<256x12xbf16>
    %c0_4 = arith.constant 0 : index
    %c0_5 = arith.constant 0 : index
    %c0_6 = arith.constant 0 : index
    %3 = vector.load %arg3[%c0_4, %c0_5, %c0_6] : memref<3x8x12xbf16, #tpu.memory_space<vmem>>, vector<1x8x12xbf16>
    %4 = vector.shape_cast %3 : vector<1x8x12xbf16> to vector<8x12xbf16>
    %cst = arith.constant dense<0.000000e+00> : vector<8x256xf32>
    %5 = tpu.matmul %4, %2, %cst {dimension_numbers = #tpu.dot_dimension_numbers<[1], [1], [0], [0], [0, 0, 1, 0], [], []>} : vector<8x12xbf16>, vector<256x12xbf16>, vector<8x256xf32> -> vector<8x256xf32>
    %c0_7 = arith.constant 0 : index
    %c0_8 = arith.constant 0 : index
    %c1 = arith.constant 1 : index
    %c0_9 = arith.constant 0 : index
    %c0_10 = arith.constant 0 : index
    %6 = vector.load %arg2[%c0_7, %c0_8, %c1, %c0_9, %c0_10] : memref<1x1x18x16x12xbf16, #tpu.memory_space<vmem>>, vector<1x1x16x16x12xbf16>
    %7 = vector.shape_cast %6 : vector<1x1x16x16x12xbf16> to vector<16x16x12xbf16>
    %8 = vector.shape_cast %7 : vector<16x16x12xbf16> to vector<256x12xbf16>
    %c1_11 = arith.constant 1 : index
    %c0_12 = arith.constant 0 : index
    %c0_13 = arith.constant 0 : index
    %9 = vector.load %arg3[%c1_11, %c0_12, %c0_13] : memref<3x8x12xbf16, #tpu.memory_space<vmem>>, vector<1x8x12xbf16>
    %10 = vector.shape_cast %9 : vector<1x8x12xbf16> to vector<8x12xbf16>
    %cst_14 = arith.constant dense<0.000000e+00> : vector<8x256xf32>
    %11 = tpu.matmul %10, %8, %cst_14 {dimension_numbers = #tpu.dot_dimension_numbers<[1], [1], [0], [0], [0, 0, 1, 0], [], []>} : vector<8x12xbf16>, vector<256x12xbf16>, vector<8x256xf32> -> vector<8x256xf32>
    %12 = arith.addf %5, %11 : vector<8x256xf32>
    %c0_15 = arith.constant 0 : index
    %c0_16 = arith.constant 0 : index
    %c2 = arith.constant 2 : index
    %c0_17 = arith.constant 0 : index
    %c0_18 = arith.constant 0 : index
    %13 = vector.load %arg2[%c0_15, %c0_16, %c2, %c0_17, %c0_18] : memref<1x1x18x16x12xbf16, #tpu.memory_space<vmem>>, vector<1x1x16x16x12xbf16>
    %14 = vector.shape_cast %13 : vector<1x1x16x16x12xbf16> to vector<16x16x12xbf16>
    %15 = vector.shape_cast %14 : vector<16x16x12xbf16> to vector<256x12xbf16>
    %c2_19 = arith.constant 2 : index
    %c0_20 = arith.constant 0 : index
    %c0_21 = arith.constant 0 : index
    %16 = vector.load %arg3[%c2_19, %c0_20, %c0_21] : memref<3x8x12xbf16, #tpu.memory_space<vmem>>, vector<1x8x12xbf16>
    %17 = vector.shape_cast %16 : vector<1x8x12xbf16> to vector<8x12xbf16>
    %cst_22 = arith.constant dense<0.000000e+00> : vector<8x256xf32>
    %18 = tpu.matmul %17, %15, %cst_22 {dimension_numbers = #tpu.dot_dimension_numbers<[1], [1], [0], [0], [0, 0, 1, 0], [], []>} : vector<8x12xbf16>, vector<256x12xbf16>, vector<8x256xf32> -> vector<8x256xf32>
    %19 = arith.addf %12, %18 : vector<8x256xf32>
    %c0_23 = arith.constant 0 : index
    %c0_24 = arith.constant 0 : index
    %20 = vector.load %arg4[%c0_23, %c0_24] : memref<8x1xf32, #tpu.memory_space<vmem>>, vector<8x1xf32>
    %21 = vector.broadcast %20 : vector<8x1xf32> to vector<8x256xf32>
    %22 = arith.addf %19, %21 : vector<8x256xf32>
    %23 = arith.negf %22 : vector<8x256xf32>
    %24 = math.exp %23 : vector<8x256xf32>
    %cst_25 = arith.constant 1.000000e+00 : f32
    %25 = vector.broadcast %cst_25 : f32 to vector<8x256xf32>
    %26 = arith.addf %25, %24 : vector<8x256xf32>
    %27 = arith.divf %25, %26 : vector<8x256xf32>
    %28 = arith.mulf %22, %27 : vector<8x256xf32>
    %29 = arith.truncf %28 : vector<8x256xf32> to vector<8x256xbf16>
    %c0_26 = arith.constant 0 : index
    %c0_27 = arith.constant 0 : index
    %c0_28 = arith.constant 0 : index
    %30 = vector.load %arg5[%c0_26, %c0_27, %c0_28] : memref<1x8x256xbf16, #tpu.memory_space<vmem>>, vector<1x8x256xbf16>
    %31 = vector.shape_cast %30 : vector<1x8x256xbf16> to vector<8x256xbf16>
    %32 = vector.shape_cast %29 : vector<8x256xbf16> to vector<1x8x256xbf16>
    tpu.vector_store %arg5[%c0_26, %c0_27, %c0_28], %32 {strides = array<i32>} : memref<1x8x256xbf16, #tpu.memory_space<vmem>>, vector<1x8x256xbf16>,
    return
  }
  func.func @transform_0(%arg0: i32, %arg1: i32) -> (i32, i32, i32, i32, i32) {
    %c0_i32 = arith.constant 0 : i32
    %c0_i32_0 = arith.constant 0 : i32
    %c0_i32_1 = arith.constant 0 : i32
    %c0_i32_2 = arith.constant 0 : i32
    return %arg0, %arg1, %c0_i32, %c0_i32_0, %c0_i32_1 : i32, i32, i32, i32, i32
  }
  func.func @transform_1(%arg0: i32, %arg1: i32) -> (i32, i32, i32) {
    %c0_i32 = arith.constant 0 : i32
    %c0_i32_0 = arith.constant 0 : i32
    %c0_i32_1 = arith.constant 0 : i32
    %c0_i32_2 = arith.constant 0 : i32
    return %c0_i32, %c0_i32_0, %c0_i32_1 : i32, i32, i32
  }
  func.func @transform_2(%arg0: i32, %arg1: i32) -> (i32, i32) {
    %c0_i32 = arith.constant 0 : i32
    %c0_i32_0 = arith.constant 0 : i32
    %c0_i32_1 = arith.constant 0 : i32
    return %c0_i32, %c0_i32_0 : i32, i32
  }
  func.func @transform_3(%arg0: i32, %arg1: i32) -> (i32, i32, i32) {
    %c0_i32 = arith.constant 0 : i32
    %c0_i32_0 = arith.constant 0 : i32
    return %arg0, %c0_i32, %arg1 : i32, i32, i32
  }
}

</mosaic_0001>

<llo_original>
// kernel: tpu_custom_call.1
$region0: #{tpu_custom_call.1}
  #allocation0 [shape = 'u32[]', space=smem, size = 0x4, offset = 0x4, fixed_abs, tag = 'smem constant byte address 0x4 - core index']
  #allocation1 [shape = 'u32[144,128]{1,0:T(1,128)}', space=vmem, size = 0x12000, scoped, tag = 'internal scratch']
  %s0 = inlined_call_operand.vmem [shape: bf16[2,1,18,16,12], index: 0, kind: input, shape index: {}]
  %s1 = inlined_call_operand.vmem [shape: bf16[3,8,12], index: 1, kind: input, shape index: {}]
  %s2 = inlined_call_operand.vmem [shape: f32[8,1], index: 2, kind: input, shape index: {}]
  %s3 = inlined_call_operand.hbm [shape: bf16[2,8,256], index: 3, kind: output, shape index: {}]
  %s4 = sld [smem:[#allocation0]]
  $region45: #{tpu_custom_call.1} parent=0
    _
  %s6 = ssub.s32 1, %s4
  %s7 = scalar_select 0, %s6, %s4
  $region1: #{tpu_custom_call.1} parent=0
    #allocation2 [shape = 'u8[8192]{0}', space=vmem, size = 0x2000, scoped, tag = 'output window, operand 0']
    #allocation3 [shape = 's32[2]{0}', space=sflag, size = 0x8, scoped, tag = 'scoped memory for tpu_custom_call.1']
    %8 = vsyncpa [#allocation3], 0
    %s9 = scalar_lea.sflag [#allocation3], 1
    %10 = vsyncpa %s9, 0
    loop: start=0, step=1, limit=4
    $region2: #{tpu_custom_call.1} parent=1 // loop_pre_header
      _
    $region3: #{tpu_custom_call.1} parent=1 // loop_header
      %s12 = sphi 0, %s16
      %p13 = scmp.ge.s32.totalorder %s12, 4
      %s19 = sphi 0, %s31
      %s20 = sphi 0, %s27
      %s21 = sphi 0, %s19
      %s22 = sphi 0, %s20
      %s23 = sphi 0, %s21
      %s24 = sphi 0, %s22
      %s36 = sphi 0, %s38
      %s39 = sphi 0, %s36
      %s40 = sphi 0, %s39
      %s56 = sphi 0, %s40
      %s60 = sphi 0, %s60
      %s62 = sphi 0, %s60
      %s63 = sphi 0, %s62
      %s77 = sphi 0, %s63
      %s81 = sphi 0, %s81
      %s83 = sphi 0, %s81
      %s84 = sphi 0, %s83
      %s98 = sphi 0, %s84
      %s106 = sphi 0, %s108
      %s109 = sphi 0, %s106
      %s110 = sphi 0, %s109
      %s126 = sphi 0, %s110
    $region4: #{tpu_custom_call.1} parent=1 // loop_header_branch
      %15 = sbr.rel (%p13) target = $region8
    $region5: #{tpu_custom_call.1} parent=1 // loop_body
      %s17 = ssub.s32 %s12, 1
      %s18 = ssub.s32 %s12, 2
      %s25 = sadd.s32 1, %s20
      %p26 = scmp.ge.s32.totalorder %s25, 1
      %s27 = scalar_select %p26, 0, %s25
      %s28 = sadd.s32 1, %s19
      %s29 = scalar_select %p26, %s28, %s19
      %p30 = scmp.ge.s32.totalorder %s29, 2
      %s31 = scalar_select %p30, 0, %s29
      %s32 = ssub.s32 %s19, %s31
      %s33 = ssub.s32 %s20, %s27
      %s34 = sor.u32 %s32, %s33
      %p35 = scmp.eq.s32.totalorder %s34, 0
      %s37 = sadd.s32 %s36, 1
      %s38 = scalar_select %p35, %s36, %s37
      %p41 = pneg %p35
      %p42 = scmp.eq.s32.totalorder %s12, 1
      %p43 = por %p41, %p42
      %p44 = scmp.ne.s32.totalorder %s36, %s39
      %p45 = scmp.eq.s32.totalorder %s12, 0
      %p46 = por %p44, %p45
      %p47 = scmp.ne.s32.totalorder %s36, %s39
      %p48 = scmp.eq.s32.totalorder %s17, 1
      %p49 = por %p47, %p48
      %p50 = scmp.ne.s32.totalorder %s39, %s40
      %p51 = scmp.eq.s32.totalorder %s17, 0
      %p52 = por %p50, %p51
      %p53 = scmp.ne.s32.totalorder %s39, %s40
      %p54 = scmp.eq.s32.totalorder %s18, 1
      %p55 = por %p53, %p54
      %p57 = scmp.ne.s32.totalorder %s40, %s56
      %p58 = scmp.eq.s32.totalorder %s18, 0
      %p59 = por %p57, %p58
      %s61 = sadd.s32 %s60, 1
      %p64 = scmp.eq.s32.totalorder %s12, 1
      %p65 = scmp.ne.s32.totalorder %s60, %s62
      %p66 = scmp.eq.s32.totalorder %s12, 0
      %p67 = por %p65, %p66
      %p68 = scmp.ne.s32.totalorder %s60, %s62
      %p69 = scmp.eq.s32.totalorder %s17, 1
      %p70 = por %p68, %p69
      %p71 = scmp.ne.s32.totalorder %s62, %s63
      %p72 = scmp.eq.s32.totalorder %s17, 0
      %p73 = por %p71, %p72
      %p74 = scmp.ne.s32.totalorder %s62, %s63
      %p75 = scmp.eq.s32.totalorder %s18, 1
      %p76 = por %p74, %p75
      %p78 = scmp.ne.s32.totalorder %s63, %s77
      %p79 = scmp.eq.s32.totalorder %s18, 0
      %p80 = por %p78, %p79
      %s82 = sadd.s32 %s81, 1
      %p85 = scmp.eq.s32.totalorder %s12, 1
      %p86 = scmp.ne.s32.totalorder %s81, %s83
      %p87 = scmp.eq.s32.totalorder %s12, 0
      %p88 = por %p86, %p87
      %p89 = scmp.ne.s32.totalorder %s81, %s83
      %p90 = scmp.eq.s32.totalorder %s17, 1
      %p91 = por %p89, %p90
      %p92 = scmp.ne.s32.totalorder %s83, %s84
      %p93 = scmp.eq.s32.totalorder %s17, 0
      %p94 = por %p92, %p93
      %p95 = scmp.ne.s32.totalorder %s83, %s84
      %p96 = scmp.eq.s32.totalorder %s18, 1
      %p97 = por %p95, %p96
      %p99 = scmp.ne.s32.totalorder %s84, %s98
      %p100 = scmp.eq.s32.totalorder %s18, 0
      %p101 = por %p99, %p100
      %s102 = ssub.s32 %s19, %s31
      %s103 = ssub.s32 %s20, %s27
      %s104 = sor.u32 %s102, %s103
      %p105 = scmp.eq.s32.totalorder %s104, 0
      %s107 = sadd.s32 %s106, 1
      %s108 = scalar_select %p105, %s106, %s107
      %p111 = pneg %p105
      %p112 = scmp.eq.s32.totalorder %s12, 1
      %p113 = por %p111, %p112
      %p114 = scmp.ne.s32.totalorder %s106, %s109
      %p115 = scmp.eq.s32.totalorder %s12, 0
      %p116 = por %p114, %p115
      %p117 = scmp.ne.s32.totalorder %s106, %s109
      %p118 = scmp.eq.s32.totalorder %s17, 1
      %p119 = por %p117, %p118
      %p120 = scmp.ne.s32.totalorder %s109, %s110
      %p121 = scmp.eq.s32.totalorder %s17, 0
      %p122 = por %p120, %p121
      %p123 = scmp.ne.s32.totalorder %s109, %s110
      %p124 = scmp.eq.s32.totalorder %s18, 1
      %p125 = por %p123, %p124
      %p127 = scmp.ne.s32.totalorder %s110, %s126
      %p128 = scmp.eq.s32.totalorder %s18, 0
      %p129 = por %p127, %p128
      %p130 = scmp.le.s32.totalorder 1, %s12
      %p131 = scmp.lt.s32.totalorder %s12, 3
      %p132 = pnand %p130, %p131
      %p133 = pneg %p132
      // Predicated region
      $region9: #{tpu_custom_call.1} parent=5 // pred_check
        _
      $region10: #{tpu_custom_call.1} parent=5 // pred_check_branch
        %135 = sbr.rel (%p132) target = $region12
      $region11: #{tpu_custom_call.1} parent=5 // pred_region
        %s136 = ssub.s32 %s12, 1
        // Predicated region
        $region13: #{tpu_custom_call.1} parent=11 // pred_check
          %p137 = pneg %p73
        $region14: #{tpu_custom_call.1} parent=11 // pred_check_branch
          %139 = sbr.rel (%p137) target = $region16
        $region15: #{tpu_custom_call.1} parent=11 // pred_region
          _
        $region16: #{tpu_custom_call.1} parent=11 // pred_fallthru
          _
        // Predicated region
        $region17: #{tpu_custom_call.1} parent=11 // pred_check
          %p140 = pneg %p94
        $region18: #{tpu_custom_call.1} parent=11 // pred_check_branch
          %142 = sbr.rel (%p140) target = $region20
        $region19: #{tpu_custom_call.1} parent=11 // pred_region
          _
        $region20: #{tpu_custom_call.1} parent=11 // pred_fallthru
          _
      $region12: #{tpu_custom_call.1} parent=5 // pred_fallthru
        _
      %p143 = scmp.lt.s32.totalorder %s12, 2
      // Predicated region
      $region21: #{tpu_custom_call.1} parent=5 // pred_check
        %p144 = pneg %p143
      $region22: #{tpu_custom_call.1} parent=5 // pred_check_branch
        %146 = sbr.rel (%p144) target = $region24
      $region23: #{tpu_custom_call.1} parent=5 // pred_region
        // Predicated region
        $region25: #{tpu_custom_call.1} parent=23 // pred_check
          %p147 = pneg %p46
        $region26: #{tpu_custom_call.1} parent=23 // pred_check_branch
          %149 = sbr.rel (%p147) target = $region28
        $region27: #{tpu_custom_call.1} parent=23 // pred_region
          %p150 = scmp.lt.s32.totalorder %s19, 1
          %s151 = scalar_select %p150, %s19, 1
          %p152 = scmp.lt.s32.totalorder %s20, 0
          %s153 = scalar_select %p152, %s20, 0
          %s154 = smul.addr %s153, 36
          %s155 = smul.addr %s151, 36
          %s156 = sadd.s32 %s154, %s155
          %s157 = smul.addr %s156, 4
          %s158 = scalar_lea.vmem %s0, %s157
        $region28: #{tpu_custom_call.1} parent=23 // pred_fallthru
          _
      $region24: #{tpu_custom_call.1} parent=5 // pred_fallthru
        _
      %p159 = scmp.le.s32.totalorder 1, %s12
      %p160 = scmp.lt.s32.totalorder %s12, 3
      %p161 = pnand %p159, %p160
      %p162 = pneg %p161
      // Predicated region
      $region29: #{tpu_custom_call.1} parent=5 // pred_check
        _
      $region30: #{tpu_custom_call.1} parent=5 // pred_check_branch
        %164 = sbr.rel (%p161) target = $region32
      $region31: #{tpu_custom_call.1} parent=5 // pred_region
        %s165 = ssub.s32 %s12, 1
        %p166 = scmp.lt.s32.totalorder %s21, 1
        %s167 = scalar_select %p166, %s21, 1
        %p168 = scmp.lt.s32.totalorder %s22, 0
        %s169 = scalar_select %p168, %s22, 0
        %s170 = smul.addr %s169, 36
        %s171 = smul.addr %s167, 36
        %s172 = sadd.s32 %s170, %s171
        %s173 = smul.addr %s172, 4
        %s174 = scalar_lea.vmem %s0, %s173
        %p175 = pneg %p52
        %p176 = pneg %p49
        %p177 = pneg %p73
        %p178 = pneg %p70
        %p179 = pneg %p94
        %p180 = pneg %p91
        %p181 = pneg %p122
        %p182 = pneg %p119
        %s183 = sand.u32 %s109, 1
        %s184 = scalar_lea.sflag [#allocation3], %s183
        %s185 = sand.u32 %s109, 1
        %s186 = smul.addr %s185, 8
        %s187 = scalar_lea.vmem [#allocation2], %s186
        %p188 = scmp.lt.s32.totalorder %s21, 1
        %s189 = scalar_select %p188, %s21, 1
        %p190 = scmp.lt.s32.totalorder %s22, 0
        %s191 = scalar_select %p190, %s22, 0
        %s192 = smul.addr %s191, 36
        %s193 = smul.addr %s189, 36
        %s194 = sadd.s32 %s192, %s193
        %s195 = smul.addr %s194, 4
        %s196 = scalar_lea.vmem %s0, %s195
        %s197 = smul.u32 2, %s22
        %v199 = vld [vmem:[%s196] sm:$0xf]
        %v200 = vld [vmem:[%s196 + $0x4] sm:$0xf]
        %v201 = vld [vmem:[%s196 + $0x8] sm:$0xf]
        %v202 = vld [vmem:[%s196 + $0xc] sm:$0xf]
        %v203 = vld [vmem:[%s196 + $0x10] sm:$0xf]
        %v204 = vld [vmem:[%s196 + $0x14] sm:$0xf]
        %v205 = vld [vmem:[%s196 + $0x18] sm:$0xf]
        %v206 = vld [vmem:[%s196 + $0x1c] sm:$0xf]
        %v207 = vld [vmem:[%s196 + $0x20] sm:$0xf]
        %v208 = vld [vmem:[%s196 + $0x24] sm:$0xf]
        %v209 = vld [vmem:[%s196 + $0x28] sm:$0xf]
        %v210 = vld [vmem:[%s196 + $0x2c] sm:$0xf]
        %v211 = vld [vmem:[%s196 + $0x30] sm:$0xf]
        %v212 = vld [vmem:[%s196 + $0x34] sm:$0xf]
        %v213 = vld [vmem:[%s196 + $0x38] sm:$0xf]
        %v214 = vld [vmem:[%s196 + $0x3c] sm:$0xf]
        %v215 = vld [vmem:[%s196 + $0x40] sm:$0xf]
        %v216 = vld [vmem:[%s196 + $0x44] sm:$0xf]
        %v217 = vld [vmem:[%s196 + $0x48] sm:$0xf]
        %v218 = vld [vmem:[%s196 + $0x4c] sm:$0xf]
        %v219 = vld [vmem:[%s196 + $0x50] sm:$0xf]
        %v220 = vld [vmem:[%s196 + $0x54] sm:$0xf]
        %v221 = vld [vmem:[%s196 + $0x58] sm:$0xf]
        %v222 = vld [vmem:[%s196 + $0x5c] sm:$0xf]
        %v223 = vld [vmem:[%s196 + $0x60] sm:$0xf]
        %v224 = vld [vmem:[%s196 + $0x64] sm:$0xf]
        %v225 = vld [vmem:[%s196 + $0x68] sm:$0xf]
        %v226 = vld [vmem:[%s196 + $0x6c] sm:$0xf]
        %v227 = vld [vmem:[%s196 + $0x70] sm:$0xf]
        %v228 = vld [vmem:[%s196 + $0x74] sm:$0xf]
        %v229 = vld [vmem:[%s196 + $0x78] sm:$0xf]
        %v230 = vld [vmem:[%s196 + $0x7c] sm:$0xf]
        %v231 = vld [vmem:[%s1] sm:$0xf]
        %s232 = scalar_lea.vmem %s196, 8
        %v233 = vld [vmem:[%s232] sm:$0xf]
        %v234 = vld [vmem:[%s232 + $0x4] sm:$0xf]
        %v235 = vld [vmem:[%s232 + $0x8] sm:$0xf]
        %v236 = vld [vmem:[%s232 + $0xc] sm:$0xf]
        %v237 = vld [vmem:[%s232 + $0x10] sm:$0xf]
        %v238 = vld [vmem:[%s232 + $0x14] sm:$0xf]
        %v239 = vld [vmem:[%s232 + $0x18] sm:$0xf]
        %v240 = vld [vmem:[%s232 + $0x1c] sm:$0xf]
        %v241 = vld [vmem:[%s232 + $0x20] sm:$0xf]
        %v242 = vld [vmem:[%s232 + $0x24] sm:$0xf]
        %v243 = vld [vmem:[%s232 + $0x28] sm:$0xf]
        %v244 = vld [vmem:[%s232 + $0x2c] sm:$0xf]
        %v245 = vld [vmem:[%s232 + $0x30] sm:$0xf]
        %v246 = vld [vmem:[%s232 + $0x34] sm:$0xf]
        %v247 = vld [vmem:[%s232 + $0x38] sm:$0xf]
        %v248 = vld [vmem:[%s232 + $0x3c] sm:$0xf]
        %v249 = vld [vmem:[%s232 + $0x40] sm:$0xf]
        %v250 = vld [vmem:[%s232 + $0x44] sm:$0xf]
        %v251 = vld [vmem:[%s232 + $0x48] sm:$0xf]
        %v252 = vld [vmem:[%s232 + $0x4c] sm:$0xf]
        %v253 = vld [vmem:[%s232 + $0x50] sm:$0xf]
        %v254 = vld [vmem:[%s232 + $0x54] sm:$0xf]
        %v255 = vld [vmem:[%s232 + $0x58] sm:$0xf]
        %v256 = vld [vmem:[%s232 + $0x5c] sm:$0xf]
        %v257 = vld [vmem:[%s232 + $0x60] sm:$0xf]
        %v258 = vld [vmem:[%s232 + $0x64] sm:$0xf]
        %v259 = vld [vmem:[%s232 + $0x68] sm:$0xf]
        %v260 = vld [vmem:[%s232 + $0x6c] sm:$0xf]
        %v261 = vld [vmem:[%s232 + $0x70] sm:$0xf]
        %v262 = vld [vmem:[%s232 + $0x74] sm:$0xf]
        %v263 = vld [vmem:[%s232 + $0x78] sm:$0xf]
        %v264 = vld [vmem:[%s232 + $0x7c] sm:$0xf]
        %s265 = scalar_lea.vmem %s1, 4
        %v266 = vld [vmem:[%s265] sm:$0xf]
        %v299 = vunpack.c.l.b16 %v233
        %v300 = vunpack.c.l.b16 %v234
        %v301 = vunpack.c.l.b16 %v235
        %v302 = vunpack.c.l.b16 %v236
        %v303 = vunpack.c.l.b16 %v237
        %v304 = vunpack.c.l.b16 %v238
        %v305 = vunpack.c.l.b16 %v239
        %v306 = vunpack.c.l.b16 %v240
        %v307 = vunpack.c.l.b16 %v241
        %v308 = vunpack.c.l.b16 %v242
        %v309 = vunpack.c.l.b16 %v243
        %v310 = vunpack.c.l.b16 %v244
        %v311 = vunpack.c.l.b16 %v245
        %v312 = vunpack.c.l.b16 %v246
        %v313 = vunpack.c.l.b16 %v247
        %v314 = vunpack.c.l.b16 %v248
        %v315 = vunpack.c.l.b16 %v249
        %v316 = vunpack.c.l.b16 %v250
        %v317 = vunpack.c.l.b16 %v251
        %v318 = vunpack.c.l.b16 %v252
        %v319 = vunpack.c.l.b16 %v253
        %v320 = vunpack.c.l.b16 %v254
        %v321 = vunpack.c.l.b16 %v255
        %v322 = vunpack.c.l.b16 %v256
        %v323 = vunpack.c.l.b16 %v257
        %v324 = vunpack.c.l.b16 %v258
        %v325 = vunpack.c.l.b16 %v259
        %v326 = vunpack.c.l.b16 %v260
        %v327 = vunpack.c.l.b16 %v261
        %v328 = vunpack.c.l.b16 %v262
        %v329 = vunpack.c.l.b16 %v263
        %v330 = vunpack.c.l.b16 %v264
        %v331 = vpack.c.b16 %v300, %v299
        %v332 = vpack.c.b16 %v302, %v301
        %v333 = vpack.c.b16 %v304, %v303
        %v334 = vpack.c.b16 %v306, %v305
        %v335 = vpack.c.b16 %v308, %v307
        %v336 = vpack.c.b16 %v310, %v309
        %v337 = vpack.c.b16 %v312, %v311
        %v338 = vpack.c.b16 %v314, %v313
        %v339 = vpack.c.b16 %v316, %v315
        %v340 = vpack.c.b16 %v318, %v317
        %v341 = vpack.c.b16 %v320, %v319
        %v342 = vpack.c.b16 %v322, %v321
        %v343 = vpack.c.b16 %v324, %v323
        %v344 = vpack.c.b16 %v326, %v325
        %v345 = vpack.c.b16 %v328, %v327
        %v346 = vpack.c.b16 %v330, %v329
        %vm347 = vcmask 97280
        %v349 = vsel %vm347, %v266, 0
        %v352 = vsel %vm347, %v331, 0
        %v355 = vsel %vm347, %v332, 0
        %v358 = vsel %vm347, %v333, 0
        %v361 = vsel %vm347, %v334, 0
        %v364 = vsel %vm347, %v335, 0
        %v367 = vsel %vm347, %v336, 0
        %v370 = vsel %vm347, %v337, 0
        %v373 = vsel %vm347, %v338, 0
        %v376 = vsel %vm347, %v339, 0
        %v379 = vsel %vm347, %v340, 0
        %v382 = vsel %vm347, %v341, 0
        %v385 = vsel %vm347, %v342, 0
        %v388 = vsel %vm347, %v343, 0
        %v391 = vsel %vm347, %v344, 0
        %v394 = vsel %vm347, %v345, 0
        %v397 = vsel %vm347, %v346, 0
        %399 = vmatprep.subr.bf16.mxu0 0
        %400 = vmatpush1.bf16.xpose.msra.mxu0 %v352
        %401 = vmatprep.subr.bf16.mxu0 0
        %402 = vmatpush1.bf16.xpose.msra.mxu0 %v355
        %403 = vmatprep.subr.bf16.mxu0 0
        %404 = vmatpush1.bf16.xpose.msra.mxu0 %v358
        %405 = vmatprep.subr.bf16.mxu0 0
        %406 = vmatpush1.bf16.xpose.msra.mxu0 %v361
        %407 = vmatprep.subr.bf16.mxu0 0
        %408 = vmatpush1.bf16.xpose.msra.mxu0 %v364
        %409 = vmatprep.subr.bf16.mxu0 0
        %410 = vmatpush1.bf16.xpose.msra.mxu0 %v367
        %411 = vmatprep.subr.bf16.mxu0 0
        %412 = vmatpush1.bf16.xpose.msra.mxu0 %v370
        %413 = vmatprep.subr.bf16.mxu0 0
        %414 = vmatpush1.bf16.xpose.msra.mxu0 %v373
        %415 = vmatprep.subr.bf16.mxu0 0
        %416 = vmatpush1.bf16.xpose.msra.mxu0 %v376
        %417 = vmatprep.subr.bf16.mxu0 0
        %418 = vmatpush1.bf16.xpose.msra.mxu0 %v379
        %419 = vmatprep.subr.bf16.mxu0 0
        %420 = vmatpush1.bf16.xpose.msra.mxu0 %v382
        %421 = vmatprep.subr.bf16.mxu0 0
        %422 = vmatpush1.bf16.xpose.msra.mxu0 %v385
        %423 = vmatprep.subr.bf16.mxu0 0
        %424 = vmatpush1.bf16.xpose.msra.mxu0 %v388
        %425 = vmatprep.subr.bf16.mxu0 0
        %426 = vmatpush1.bf16.xpose.msra.mxu0 %v391
        %427 = vmatprep.subr.bf16.mxu0 0
        %428 = vmatpush1.bf16.xpose.msra.mxu0 %v394
        %429 = vmatprep.subr.bf16.mxu0 0
        %430 = vmatpush1.bf16.xpose.msra.mxu0 %v397
        %431 = vmatprep.mubr.bf16.mxu0 0
        %432 = vmatmul.mubr.bf16.gmra.mrb[0].mxu0 %v349
        %v433 = vpop.f32.mrb[0].mxu0
        %v434 = vadd.f32 0.0, %v433
        %v435 = vpop.f32.mrb[0].mxu0
        %v436 = vadd.f32 0.0, %v435
        %v437 = vpop.f32.mrb[0].mxu0
        %v438 = vpop.f32.mrb[0].mxu0
        %439 = vdwg.mxu0
        %v472 = vunpack.c.l.b16 %v199
        %v473 = vunpack.c.l.b16 %v200
        %v474 = vunpack.c.l.b16 %v201
        %v475 = vunpack.c.l.b16 %v202
        %v476 = vunpack.c.l.b16 %v203
        %v477 = vunpack.c.l.b16 %v204
        %v478 = vunpack.c.l.b16 %v205
        %v479 = vunpack.c.l.b16 %v206
        %v480 = vunpack.c.l.b16 %v207
        %v481 = vunpack.c.l.b16 %v208
        %v482 = vunpack.c.l.b16 %v209
        %v483 = vunpack.c.l.b16 %v210
        %v484 = vunpack.c.l.b16 %v211
        %v485 = vunpack.c.l.b16 %v212
        %v486 = vunpack.c.l.b16 %v213
        %v487 = vunpack.c.l.b16 %v214
        %v488 = vunpack.c.l.b16 %v215
        %v489 = vunpack.c.l.b16 %v216
        %v490 = vunpack.c.l.b16 %v217
        %v491 = vunpack.c.l.b16 %v218
        %v492 = vunpack.c.l.b16 %v219
        %v493 = vunpack.c.l.b16 %v220
        %v494 = vunpack.c.l.b16 %v221
        %v495 = vunpack.c.l.b16 %v222
        %v496 = vunpack.c.l.b16 %v223
        %v497 = vunpack.c.l.b16 %v224
        %v498 = vunpack.c.l.b16 %v225
        %v499 = vunpack.c.l.b16 %v226
        %v500 = vunpack.c.l.b16 %v227
        %v501 = vunpack.c.l.b16 %v228
        %v502 = vunpack.c.l.b16 %v229
        %v503 = vunpack.c.l.b16 %v230
        %v504 = vpack.c.b16 %v473, %v472
        %v505 = vpack.c.b16 %v475, %v474
        %v506 = vpack.c.b16 %v477, %v476
        %v507 = vpack.c.b16 %v479, %v478
        %v508 = vpack.c.b16 %v481, %v480
        %v509 = vpack.c.b16 %v483, %v482
        %v510 = vpack.c.b16 %v485, %v484
        %v511 = vpack.c.b16 %v487, %v486
        %v512 = vpack.c.b16 %v489, %v488
        %v513 = vpack.c.b16 %v491, %v490
        %v514 = vpack.c.b16 %v493, %v492
        %v515 = vpack.c.b16 %v495, %v494
        %v516 = vpack.c.b16 %v497, %v496
        %v517 = vpack.c.b16 %v499, %v498
        %v518 = vpack.c.b16 %v501, %v500
        %v519 = vpack.c.b16 %v503, %v502
        %v521 = vsel %vm347, %v231, 0
        %v524 = vsel %vm347, %v504, 0
        %v527 = vsel %vm347, %v505, 0
        %v530 = vsel %vm347, %v506, 0
        %v533 = vsel %vm347, %v507, 0
        %v536 = vsel %vm347, %v508, 0
        %v539 = vsel %vm347, %v509, 0
        %v542 = vsel %vm347, %v510, 0
        %v545 = vsel %vm347, %v511, 0
        %v548 = vsel %vm347, %v512, 0
        %v551 = vsel %vm347, %v513, 0
        %v554 = vsel %vm347, %v514, 0
        %v557 = vsel %vm347, %v515, 0
        %v560 = vsel %vm347, %v516, 0
        %v563 = vsel %vm347, %v517, 0
        %v566 = vsel %vm347, %v518, 0
        %v569 = vsel %vm347, %v519, 0
        %571 = vmatprep.subr.bf16.mxu0 0
        %572 = vmatpush1.bf16.xpose.msra.mxu0 %v524
        %573 = vmatprep.subr.bf16.mxu0 0
        %574 = vmatpush1.bf16.xpose.msra.mxu0 %v527
        %575 = vmatprep.subr.bf16.mxu0 0
        %576 = vmatpush1.bf16.xpose.msra.mxu0 %v530
        %577 = vmatprep.subr.bf16.mxu0 0
        %578 = vmatpush1.bf16.xpose.msra.mxu0 %v533
        %579 = vmatprep.subr.bf16.mxu0 0
        %580 = vmatpush1.bf16.xpose.msra.mxu0 %v536
        %581 = vmatprep.subr.bf16.mxu0 0
        %582 = vmatpush1.bf16.xpose.msra.mxu0 %v539
        %583 = vmatprep.subr.bf16.mxu0 0
        %584 = vmatpush1.bf16.xpose.msra.mxu0 %v542
        %585 = vmatprep.subr.bf16.mxu0 0
        %586 = vmatpush1.bf16.xpose.msra.mxu0 %v545
        %587 = vmatprep.subr.bf16.mxu0 0
        %588 = vmatpush1.bf16.xpose.msra.mxu0 %v548
        %589 = vmatprep.subr.bf16.mxu0 0
        %590 = vmatpush1.bf16.xpose.msra.mxu0 %v551
        %591 = vmatprep.subr.bf16.mxu0 0
        %592 = vmatpush1.bf16.xpose.msra.mxu0 %v554
        %593 = vmatprep.subr.bf16.mxu0 0
        %594 = vmatpush1.bf16.xpose.msra.mxu0 %v557
        %595 = vmatprep.subr.bf16.mxu0 0
        %596 = vmatpush1.bf16.xpose.msra.mxu0 %v560
        %597 = vmatprep.subr.bf16.mxu0 0
        %598 = vmatpush1.bf16.xpose.msra.mxu0 %v563
        %599 = vmatprep.subr.bf16.mxu0 0
        %600 = vmatpush1.bf16.xpose.msra.mxu0 %v566
        %601 = vmatprep.subr.bf16.mxu0 0
        %602 = vmatpush1.bf16.xpose.msra.mxu0 %v569
        %603 = vmatprep.mubr.bf16.mxu0 0
        %604 = vmatmul.mubr.bf16.gmra.mrb[0].mxu0 %v521
        %v605 = vpop.f32.mrb[0].mxu0
        %v606 = vadd.f32 %v434, %v605
        %v607 = vpop.f32.mrb[0].mxu0
        %v608 = vadd.f32 %v436, %v607
        %v609 = vpop.f32.mrb[0].mxu0
        %v610 = vpop.f32.mrb[0].mxu0
        %611 = vdwg.mxu0
        %s612 = scalar_lea.vmem %s196, 16
        %v613 = vld [vmem:[%s612] sm:$0xf]
        %v614 = vld [vmem:[%s612 + $0x4] sm:$0xf]
        %v615 = vld [vmem:[%s612 + $0x8] sm:$0xf]
        %v616 = vld [vmem:[%s612 + $0xc] sm:$0xf]
        %v617 = vld [vmem:[%s612 + $0x10] sm:$0xf]
        %v618 = vld [vmem:[%s612 + $0x14] sm:$0xf]
        %v619 = vld [vmem:[%s612 + $0x18] sm:$0xf]
        %v620 = vld [vmem:[%s612 + $0x1c] sm:$0xf]
        %v621 = vld [vmem:[%s612 + $0x20] sm:$0xf]
        %v622 = vld [vmem:[%s612 + $0x24] sm:$0xf]
        %v623 = vld [vmem:[%s612 + $0x28] sm:$0xf]
        %v624 = vld [vmem:[%s612 + $0x2c] sm:$0xf]
        %v625 = vld [vmem:[%s612 + $0x30] sm:$0xf]
        %v626 = vld [vmem:[%s612 + $0x34] sm:$0xf]
        %v627 = vld [vmem:[%s612 + $0x38] sm:$0xf]
        %v628 = vld [vmem:[%s612 + $0x3c] sm:$0xf]
        %v629 = vld [vmem:[%s612 + $0x40] sm:$0xf]
        %v630 = vld [vmem:[%s612 + $0x44] sm:$0xf]
        %v631 = vld [vmem:[%s612 + $0x48] sm:$0xf]
        %v632 = vld [vmem:[%s612 + $0x4c] sm:$0xf]
        %v633 = vld [vmem:[%s612 + $0x50] sm:$0xf]
        %v634 = vld [vmem:[%s612 + $0x54] sm:$0xf]
        %v635 = vld [vmem:[%s612 + $0x58] sm:$0xf]
        %v636 = vld [vmem:[%s612 + $0x5c] sm:$0xf]
        %v637 = vld [vmem:[%s612 + $0x60] sm:$0xf]
        %v638 = vld [vmem:[%s612 + $0x64] sm:$0xf]
        %v639 = vld [vmem:[%s612 + $0x68] sm:$0xf]
        %v640 = vld [vmem:[%s612 + $0x6c] sm:$0xf]
        %v641 = vld [vmem:[%s612 + $0x70] sm:$0xf]
        %v642 = vld [vmem:[%s612 + $0x74] sm:$0xf]
        %v643 = vld [vmem:[%s612 + $0x78] sm:$0xf]
        %v644 = vld [vmem:[%s612 + $0x7c] sm:$0xf]
        %s645 = scalar_lea.vmem %s1, 8
        %v646 = vld [vmem:[%s645] sm:$0xf]
        %v679 = vunpack.c.l.b16 %v613
        %v680 = vunpack.c.l.b16 %v614
        %v681 = vunpack.c.l.b16 %v615
        %v682 = vunpack.c.l.b16 %v616
        %v683 = vunpack.c.l.b16 %v617
        %v684 = vunpack.c.l.b16 %v618
        %v685 = vunpack.c.l.b16 %v619
        %v686 = vunpack.c.l.b16 %v620
        %v687 = vunpack.c.l.b16 %v621
        %v688 = vunpack.c.l.b16 %v622
        %v689 = vunpack.c.l.b16 %v623
        %v690 = vunpack.c.l.b16 %v624
        %v691 = vunpack.c.l.b16 %v625
        %v692 = vunpack.c.l.b16 %v626
        %v693 = vunpack.c.l.b16 %v627
        %v694 = vunpack.c.l.b16 %v628
        %v695 = vunpack.c.l.b16 %v629
        %v696 = vunpack.c.l.b16 %v630
        %v697 = vunpack.c.l.b16 %v631
        %v698 = vunpack.c.l.b16 %v632
        %v699 = vunpack.c.l.b16 %v633
        %v700 = vunpack.c.l.b16 %v634
        %v701 = vunpack.c.l.b16 %v635
        %v702 = vunpack.c.l.b16 %v636
        %v703 = vunpack.c.l.b16 %v637
        %v704 = vunpack.c.l.b16 %v638
        %v705 = vunpack.c.l.b16 %v639
        %v706 = vunpack.c.l.b16 %v640
        %v707 = vunpack.c.l.b16 %v641
        %v708 = vunpack.c.l.b16 %v642
        %v709 = vunpack.c.l.b16 %v643
        %v710 = vunpack.c.l.b16 %v644
        %v711 = vpack.c.b16 %v680, %v679
        %v712 = vpack.c.b16 %v682, %v681
        %v713 = vpack.c.b16 %v684, %v683
        %v714 = vpack.c.b16 %v686, %v685
        %v715 = vpack.c.b16 %v688, %v687
        %v716 = vpack.c.b16 %v690, %v689
        %v717 = vpack.c.b16 %v692, %v691
        %v718 = vpack.c.b16 %v694, %v693
        %v719 = vpack.c.b16 %v696, %v695
        %v720 = vpack.c.b16 %v698, %v697
        %v721 = vpack.c.b16 %v700, %v699
        %v722 = vpack.c.b16 %v702, %v701
        %v723 = vpack.c.b16 %v704, %v703
        %v724 = vpack.c.b16 %v706, %v705
        %v725 = vpack.c.b16 %v708, %v707
        %v726 = vpack.c.b16 %v710, %v709
        %v728 = vsel %vm347, %v646, 0
        %v731 = vsel %vm347, %v711, 0
        %v734 = vsel %vm347, %v712, 0
        %v737 = vsel %vm347, %v713, 0
        %v740 = vsel %vm347, %v714, 0
        %v743 = vsel %vm347, %v715, 0
        %v746 = vsel %vm347, %v716, 0
        %v749 = vsel %vm347, %v717, 0
        %v752 = vsel %vm347, %v718, 0
        %v755 = vsel %vm347, %v719, 0
        %v758 = vsel %vm347, %v720, 0
        %v761 = vsel %vm347, %v721, 0
        %v764 = vsel %vm347, %v722, 0
        %v767 = vsel %vm347, %v723, 0
        %v770 = vsel %vm347, %v724, 0
        %v773 = vsel %vm347, %v725, 0
        %v776 = vsel %vm347, %v726, 0
        %778 = vmatprep.subr.bf16.mxu0 0
        %779 = vmatpush1.bf16.xpose.msra.mxu0 %v731
        %780 = vmatprep.subr.bf16.mxu0 0
        %781 = vmatpush1.bf16.xpose.msra.mxu0 %v734
        %782 = vmatprep.subr.bf16.mxu0 0
        %783 = vmatpush1.bf16.xpose.msra.mxu0 %v737
        %784 = vmatprep.subr.bf16.mxu0 0
        %785 = vmatpush1.bf16.xpose.msra.mxu0 %v740
        %786 = vmatprep.subr.bf16.mxu0 0
        %787 = vmatpush1.bf16.xpose.msra.mxu0 %v743
        %788 = vmatprep.subr.bf16.mxu0 0
        %789 = vmatpush1.bf16.xpose.msra.mxu0 %v746
        %790 = vmatprep.subr.bf16.mxu0 0
        %791 = vmatpush1.bf16.xpose.msra.mxu0 %v749
        %792 = vmatprep.subr.bf16.mxu0 0
        %793 = vmatpush1.bf16.xpose.msra.mxu0 %v752
        %794 = vmatprep.subr.bf16.mxu0 0
        %795 = vmatpush1.bf16.xpose.msra.mxu0 %v755
        %796 = vmatprep.subr.bf16.mxu0 0
        %797 = vmatpush1.bf16.xpose.msra.mxu0 %v758
        %798 = vmatprep.subr.bf16.mxu0 0
        %799 = vmatpush1.bf16.xpose.msra.mxu0 %v761
        %800 = vmatprep.subr.bf16.mxu0 0
        %801 = vmatpush1.bf16.xpose.msra.mxu0 %v764
        %802 = vmatprep.subr.bf16.mxu0 0
        %803 = vmatpush1.bf16.xpose.msra.mxu0 %v767
        %804 = vmatprep.subr.bf16.mxu0 0
        %805 = vmatpush1.bf16.xpose.msra.mxu0 %v770
        %806 = vmatprep.subr.bf16.mxu0 0
        %807 = vmatpush1.bf16.xpose.msra.mxu0 %v773
        %808 = vmatprep.subr.bf16.mxu0 0
        %809 = vmatpush1.bf16.xpose.msra.mxu0 %v776
        %810 = vmatprep.mubr.bf16.mxu0 0
        %811 = vmatmul.mubr.bf16.gmra.mrb[0].mxu0 %v728
        %v812 = vpop.f32.mrb[0].mxu0
        %v813 = vadd.f32 0.0, %v812
        %v814 = vpop.f32.mrb[0].mxu0
        %v815 = vadd.f32 0.0, %v814
        %v816 = vpop.f32.mrb[0].mxu0
        %v817 = vpop.f32.mrb[0].mxu0
        %818 = vdwg.mxu0
        %v819 = vadd.f32 %v606, %v813
        %v820 = vadd.f32 %v608, %v815
        %v821 = vld [vmem:[%s2] sm:$0xff]
        %823 = vset.pattern.permute.xlu0 0
        %824 = vperm.xlu0 %823, %v821
        %v825 = vpop.permute.xlu0 %824
        %v827 = vadd.f32 %v819, %v825
        %v828 = vadd.f32 %v820, %v825
        %v829 = vxor.u32 %v827, 2147483648
        %v830 = vxor.u32 %v828, 2147483648
        %v831 = vmul.f32 %v829, 1.442695
        %v832 = vpow.pop %v831
        %v833 = vmul.f32 %v830, 1.442695
        %v834 = vpow.pop %v833
        %v835 = vadd.f32 %v832, 1.0
        %v836 = vadd.f32 %v834, 1.0
        %v837 = vrcp.pop %v835
        %v838 = vmul.f32 1.0, %v837
        %v839 = vrcp.pop %v836
        %v840 = vmul.f32 1.0, %v839
        %v841 = vmul.f32 %v827, %v838
        %v842 = vmul.f32 %v828, %v840
        %v843 = vpack.c.bf16 %v841, %v841
        %v844 = vpack.c.bf16 %v842, %v842
        %v847 = vunpack.c.l.b16 %v843
        %v848 = vunpack.c.l.b16 %v844
        %v849 = vpack.c.b16 %v848, %v847
        %851 = vst [vmem:[%s187] sm:$0xff] %v849
        %s852 = sand.u32 %s109, 1
        %s853 = scalar_lea.sflag [#allocation3], %s852
        %s854 = sand.u32 %s109, 1
        %s855 = smul.addr %s854, 8
        %s856 = scalar_lea.vmem [#allocation2], %s855
        // Predicated region
        $region33: #{tpu_custom_call.1} parent=31 // pred_check
          %p857 = pneg %p119
        $region34: #{tpu_custom_call.1} parent=31 // pred_check_branch
          %859 = sbr.rel (%p857) target = $region36
        $region35: #{tpu_custom_call.1} parent=31 // pred_region
          %s860 = smul.u32 2, %s22
          %s862 = ssub.s32 128, 128
          %863 = vsyncadd %s853, %s862
          %s864 = smul.addr %s21, 2
          %s865 = sadd.s32 %s860, %s864
          %s866 = smul.addr %s865, 64
          %s867 = scalar_lea.hbm %s3, %s866
          %s869 = sshll.u32 %s856, 4
          %s870 = int_to_ptr.vmem [resolvable:$true] %s869
          %872 = dma.vmem_to_hbm [thread:$0]  %s870, 128, %s867, %s853
        $region36: #{tpu_custom_call.1} parent=31 // pred_fallthru
          _
      $region32: #{tpu_custom_call.1} parent=5 // pred_fallthru
        _
      %p873 = scmp.le.s32.totalorder 2, %s12
      // Predicated region
      $region37: #{tpu_custom_call.1} parent=5 // pred_check
        %p874 = pneg %p873
      $region38: #{tpu_custom_call.1} parent=5 // pred_check_branch
        %876 = sbr.rel (%p874) target = $region40
      $region39: #{tpu_custom_call.1} parent=5 // pred_region
        %s877 = ssub.s32 %s12, 2
        // Predicated region
        $region41: #{tpu_custom_call.1} parent=39 // pred_check
          %p878 = pneg %p125
        $region42: #{tpu_custom_call.1} parent=39 // pred_check_branch
          %880 = sbr.rel (%p878) target = $region44
        $region43: #{tpu_custom_call.1} parent=39 // pred_region
          %s881 = sand.u32 %s110, 1
          %s882 = scalar_lea.sflag [#allocation3], %s881
          %s883 = sand.u32 %s110, 1
          %s884 = smul.addr %s883, 8
          %s885 = scalar_lea.vmem [#allocation2], %s884
          %886 = dma.done %s882, 128
        $region44: #{tpu_custom_call.1} parent=39 // pred_fallthru
          _
      $region40: #{tpu_custom_call.1} parent=5 // pred_fallthru
        _
    $region6: #{tpu_custom_call.1} parent=1 // loop_footer
      %s16 = sadd.s32 1, %s12
    $region7: #{tpu_custom_call.1} parent=1 // loop_footer_branch
      %11 = sbr.rel target = $region3
    $region8: #{tpu_custom_call.1} parent=1 // loop_exit
      _
    %887 = vsyncpa [#allocation3], 1
    %s888 = scalar_lea.sflag [#allocation3], 1
    %889 = vsyncpa %s888, 1

</llo_original>
